<compile_context>
chip_gen: v7x
topology: tpu7x:2x2x1
jax: 0.10.0
libtpu: 0.0.40
codegen_flags: <defaults>
</compile_context>

<pallas_src>
import jax
import jax.numpy as jnp
from jax import lax
from jax.experimental import pallas as pl
from jax.experimental.pallas import tpu as pltpu


def _distmult_kernel(h_ref, w_ref, out_ref):
    # h_ref:   (B, D)       resident every grid step (streaming dtype)
    # w_ref:   (TILE_E, D)  streamed slice of the entity embedding table
    # out_ref: (B, TILE_E)  slice of the score matrix
    # TODO(synk): on v5e verify via pl.lower_as_mlir that this contraction does
    # not emit a per-step vxpose; if it does, pre-transpose emb_e to (D, E) at
    # prep time and stream (D, tile) slices with a plain (B,D)@(D,tile) matmul.
    logits = lax.dot_general(
        h_ref[...], w_ref[...],
        dimension_numbers=(((1,), (1,)), ((), ())),   # contract over D, no transpose
        preferred_element_type=jnp.float32,           # f32 accumulate on the MXU
    )
    out_ref[...] = jax.nn.sigmoid(logits).astype(out_ref.dtype)  # EUP/VPU (free filler)


def _round_up(x, m):
    return ((x + m - 1) // m) * m


def _choose_tile_e(E, D, w_itemsize, out_itemsize, requested, batch, *,
                   min_grid_steps=8, min_step_bytes=1 << 20,
                   vmem_budget_bytes=16 << 20):
    """Pick a lane-aligned entity tile that
       (a) keeps >= min_grid_steps grid steps on large tables (v7x megacore +
           pipeline depth), BUT never shrinks a step's table DMA below
           ~min_step_bytes (per-grid-step overhead floor),
       (b) fits double-buffered w + out tiles in a conservative VMEM budget
           (safe under v5e's 16 MiB scoped default without raising limits)."""
    E128 = _round_up(E, 128)
    tile = max(128, (int(requested) // 128) * 128)
    tile = min(tile, E128)
    # Step-count cap for megacore sharding ...
    steps_cap = _round_up(pl.cdiv(E128, min_grid_steps), 128)
    # ... but the per-step DMA-size floor takes precedence.
    dma_floor = min(E128, _round_up(pl.cdiv(min_step_bytes, D * w_itemsize), 128))
    tile = min(tile, max(steps_cap, dma_floor))
    # Fit double-buffered w tile + double-buffered out tile (h is negligible).
    while tile > 128 and (2 * tile * D * w_itemsize
                          + 2 * batch * tile * out_itemsize) > vmem_budget_bytes:
        tile = _round_up(tile // 2, 128)
    return max(tile, 128)


def prepare_distmult(emb_e, emb_rel, compute_dtype=jnp.bfloat16):
    """One-time weight prep (hoisted out of the per-call forward): cast the
    embedding tables to the streaming dtype once at init / param load. Pass
    compute_dtype=jnp.float32 for bit-exact f32 parity with the reference."""
    return emb_e.astype(compute_dtype), emb_rel.astype(compute_dtype)


def distmult_forward(e1, rel, emb_e, emb_rel, *, tile_e=8192,
                     out_dtype=jnp.bfloat16):
    """Full DistMult forward. `emb_e` / `emb_rel` should already be in the
    streaming dtype (use prepare_distmult once) — no per-call cast or pad here.
    Embedding gathers + the tiny (B, D) multiply are glue (plain JAX); the
    bandwidth-bound table-stream matmul + sigmoid run in the Pallas kernel."""
    # TODO(synk): input dropout (Config.input_dropout) is a no-op in eval mode; not applied.
    e1_emb = jnp.take(emb_e, e1.reshape(-1), axis=0)      # (B, D)
    rel_emb = jnp.take(emb_rel, rel.reshape(-1), axis=0)  # (B, D)
    h = e1_emb * rel_emb                                   # hoisted out of the kernel

    B, D = h.shape
    E = emb_e.shape[0]
    w_itemsize = jnp.dtype(emb_e.dtype).itemsize
    out_itemsize = jnp.dtype(out_dtype).itemsize

    tile = _choose_tile_e(E, D, w_itemsize, out_itemsize, tile_e, B)
    grid = (pl.cdiv(E, tile),)   # ragged last tile handled by Pallas (no jnp.pad)

    cost = pl.CostEstimate(
        flops=2 * B * E * D,
        transcendentals=B * E,
        bytes_accessed=E * D * w_itemsize + B * E * out_itemsize + B * D * w_itemsize,
    )

    # TODO(synk): for production batches, grow the resident B block (sublane dim
    # of h/out) rather than adding a leading B grid axis; if B must be tiled,
    # make it the inner "arbitrary" axis so the table is streamed exactly once.
    # TODO(synk): for tiny tables (tile stuck at 128-512 with >=3 steps), add
    # pipeline_mode=pl.Buffered(3) on the entity-table BlockSpec.
    out = pl.pallas_call(
        _distmult_kernel,
        out_shape=jax.ShapeDtypeStruct((B, E), out_dtype),
        grid_spec=pltpu.PrefetchScalarGridSpec(
            num_scalar_prefetch=0,
            grid=grid,
            in_specs=[
                pl.BlockSpec((B, D), lambda j: (0, 0)),        # h (resident)
                pl.BlockSpec((tile, D), lambda j: (j, 0)),     # entity table slice (streamed)
            ],
            out_specs=pl.BlockSpec((B, tile), lambda j: (0, j)),
        ),
        compiler_params=pltpu.CompilerParams(
            dimension_semantics=("parallel",)),                # lets v7x shard the entity axis
        cost_estimate=cost,
    )(h, emb_e)

    return out


def _xavier_normal(key, shape):
    fan_in, fan_out = shape[1], shape[0]
    std = (2.0 / (fan_in + fan_out)) ** 0.5
    return std * jax.random.normal(key, shape, dtype=jnp.float32)


if __name__ == "__main__":
    # Small, deterministic setup consistent with the module's __init__.
    EMBEDDING_DIM = 128      # Config.embedding_dim
    NUM_ENTITIES = 256
    NUM_RELATIONS = 32
    BATCH = 8

    key = jax.random.PRNGKey(0)
    k_e, k_r, k_i1, k_i2 = jax.random.split(key, 4)

    emb_e = _xavier_normal(k_e, (NUM_ENTITIES, EMBEDDING_DIM))
    emb_rel = _xavier_normal(k_r, (NUM_RELATIONS, EMBEDDING_DIM))
    # padding_idx=0 -> row 0 is zeros
    emb_e = emb_e.at[0].set(0.0)
    emb_rel = emb_rel.at[0].set(0.0)

    # One-time table prep (hoisted out of the per-call forward path).
    emb_e_c, emb_rel_c = prepare_distmult(emb_e, emb_rel)

    # e1 / rel come in as (B, 1) index tensors in the original pipeline.
    e1 = jax.random.randint(k_i1, (BATCH, 1), 0, NUM_ENTITIES, dtype=jnp.int32)
    rel = jax.random.randint(k_i2, (BATCH, 1), 0, NUM_RELATIONS, dtype=jnp.int32)

    pred = distmult_forward(e1, rel, emb_e_c, emb_rel_c)
    pred = jax.block_until_ready(pred)

    # Pure-JAX f32 reference check (bf16 stream + bf16 scores -> loosened tolerance).
    e1_emb = emb_e[e1.reshape(-1)]
    rel_emb = emb_rel[rel.reshape(-1)]
    ref = jax.nn.sigmoid((e1_emb * rel_emb) @ emb_e.T)
    assert pred.shape == (BATCH, NUM_ENTITIES)
    err = jnp.max(jnp.abs(pred.astype(jnp.float32) - ref))
    assert jnp.allclose(pred.astype(jnp.float32), ref, atol=2e-2, rtol=2e-2), float(err)

    print("KERNEL_OK")
</pallas_src>

<mosaic_0001>
module attributes {stable_mosaic.version = 11 : i64} {
  func.func @_distmult_kernel(%arg0: i32, %arg1: memref<8x128xbf16, #tpu.memory_space<vmem>>, %arg2: memref<256x128xbf16, #tpu.memory_space<vmem>>, %arg3: memref<8x256xbf16, #tpu.memory_space<vmem>>) attributes {dimension_semantics = [#tpu.dimension_semantics<parallel>], iteration_bounds = array<i64: 1>, scalar_prefetch = 0 : i64, scratch_operands = 0 : i64, tpu.core_type = #tpu.core_type<tc>, window_params = [{pipeline_mode = #tpu.pipeline_mode<synchronous>, transform_indices = @transform_0, window_bounds = array<i64: 8, 128>}, {transform_indices = @transform_1, window_bounds = array<i64: 256, 128>}, {transform_indices = @transform_2, window_bounds = array<i64: 8, 256>}]} {
    %c0 = arith.constant 0 : index
    %c0_0 = arith.constant 0 : index
    %0 = vector.load %arg1[%c0, %c0_0] : memref<8x128xbf16, #tpu.memory_space<vmem>>, vector<8x128xbf16>
    %c0_1 = arith.constant 0 : index
    %c0_2 = arith.constant 0 : index
    %1 = vector.load %arg2[%c0_1, %c0_2] : memref<256x128xbf16, #tpu.memory_space<vmem>>, vector<256x128xbf16>
    %cst = arith.constant dense<0.000000e+00> : vector<8x256xf32>
    %2 = tpu.matmul %0, %1, %cst {dimension_numbers = #tpu.dot_dimension_numbers<[1], [1], [0], [0], [0, 0, 1, 0], [], []>} : vector<8x128xbf16>, vector<256x128xbf16>, vector<8x256xf32> -> vector<8x256xf32>
    %3 = arith.negf %2 : vector<8x256xf32>
    %4 = math.exp %3 : vector<8x256xf32>
    %cst_3 = arith.constant 1.000000e+00 : f32
    %5 = vector.broadcast %cst_3 : f32 to vector<8x256xf32>
    %6 = arith.addf %5, %4 : vector<8x256xf32>
    %7 = arith.divf %5, %6 : vector<8x256xf32>
    %8 = arith.truncf %7 : vector<8x256xf32> to vector<8x256xbf16>
    %c0_4 = arith.constant 0 : index
    %c0_5 = arith.constant 0 : index
    %9 = vector.load %arg3[%c0_4, %c0_5] : memref<8x256xbf16, #tpu.memory_space<vmem>>, vector<8x256xbf16>
    tpu.vector_store %arg3[%c0_4, %c0_5], %8 {strides = array<i32>} : memref<8x256xbf16, #tpu.memory_space<vmem>>, vector<8x256xbf16>,
    return
  }
  func.func @transform_0(%arg0: i32) -> (i32, i32) {
    %c0_i32 = arith.constant 0 : i32
    %c0_i32_0 = arith.constant 0 : i32
    %c0_i32_1 = arith.constant 0 : i32
    return %c0_i32, %c0_i32_0 : i32, i32
  }
  func.func @transform_1(%arg0: i32) -> (i32, i32) {
    %c0_i32 = arith.constant 0 : i32
    %c0_i32_0 = arith.constant 0 : i32
    return %arg0, %c0_i32 : i32, i32
  }
  func.func @transform_2(%arg0: i32) -> (i32, i32) {
    %c0_i32 = arith.constant 0 : i32
    %c0_i32_0 = arith.constant 0 : i32
    return %c0_i32, %arg0 : i32, i32
  }
}

</mosaic_0001>

<llo_original>
// kernel: tpu_custom_call.1
$region0: #{tpu_custom_call.1}
  #allocation0 [shape = 'u32[]', space=smem, size = 0x4, offset = 0x4, fixed_abs, tag = 'smem constant byte address 0x4 - core index']
  #allocation1 [shape = 'u32[144,128]{1,0:T(1,128)}', space=vmem, size = 0x12000, scoped, tag = 'internal scratch']
  %s0 = inlined_call_operand.hbm [shape: bf16[8,128], index: 0, kind: input, shape index: {}]
  %s1 = inlined_call_operand.hbm [shape: bf16[256,128], index: 1, kind: input, shape index: {}]
  %s2 = inlined_call_operand.hbm [shape: bf16[8,256], index: 2, kind: output, shape index: {}]
  %s3 = sld [smem:[#allocation0]]
  $region26: #{tpu_custom_call.1} parent=0
    _
  %s5 = ssub.s32 1, %s3
  %s6 = scalar_select 0, %s5, %s3
  $region1: #{tpu_custom_call.1} parent=0
    #allocation2 [shape = 'u8[2048]{0}', space=vmem, size = 0x800, scoped, tag = 'input window, operand 0, single buffered']
    #allocation3 [shape = 's32[1]{0}', space=sflag, size = 0x4, scoped, tag = 'scoped memory for tpu_custom_call.1']
    #allocation4 [shape = 's32[1]{0}', space=sflag, size = 0x4, scoped, tag = 'scoped memory for tpu_custom_call.1']
    #allocation5 [shape = 'u8[65536]{0}', space=vmem, size = 0x10000, scoped, tag = 'input window, operand 1, single buffered']
    #allocation6 [shape = 's32[1]{0}', space=sflag, size = 0x4, scoped, tag = 'scoped memory for tpu_custom_call.1']
    #allocation7 [shape = 'u8[4096]{0}', space=vmem, size = 0x1000, scoped, tag = 'output window, operand 0, single buffered']
    %7 = vsyncpa [#allocation3], 0
    %8 = vsyncpa [#allocation6], 0
    %9 = vsyncpa [#allocation4], 0
    // Predicated region
    $region2: #{tpu_custom_call.1} parent=1 // pred_check
      _
    $region3: #{tpu_custom_call.1} parent=1 // pred_check_branch
      %11 = sbr.rel (0) target = $region5
    $region4: #{tpu_custom_call.1} parent=1 // pred_region
      %s13 = ssub.s32 64, 64
      %14 = vsyncadd [#allocation3], %s13
      %s16 = sshll.u32 [#allocation2], 4
      %s17 = int_to_ptr.vmem [resolvable:$true] %s16
      %19 = dma.hbm_to_vmem [thread:$0]  %s0, 64, %s17, [#allocation3]
    $region5: #{tpu_custom_call.1} parent=1 // pred_fallthru
      _
    // Predicated region
    $region6: #{tpu_custom_call.1} parent=1 // pred_check
      _
    $region7: #{tpu_custom_call.1} parent=1 // pred_check_branch
      %21 = sbr.rel (0) target = $region9
    $region8: #{tpu_custom_call.1} parent=1 // pred_region
      %s23 = ssub.s32 2048, 2048
      %24 = vsyncadd [#allocation6], %s23
      %s25 = sshll.u32 [#allocation5], 4
      %s26 = int_to_ptr.vmem [resolvable:$true] %s25
      %31 = dma.hbm_to_vmem [thread:$0]  %s1, 2048, %s26, [#allocation6], 64, 64, 4
    $region9: #{tpu_custom_call.1} parent=1 // pred_fallthru
      _
    // Predicated region
    $region10: #{tpu_custom_call.1} parent=1 // pred_check
      _
    $region11: #{tpu_custom_call.1} parent=1 // pred_check_branch
      %33 = sbr.rel (0) target = $region13
    $region12: #{tpu_custom_call.1} parent=1 // pred_region
      %34 = dma.done [#allocation3], 64
    $region13: #{tpu_custom_call.1} parent=1 // pred_fallthru
      _
    // Predicated region
    $region14: #{tpu_custom_call.1} parent=1 // pred_check
      _
    $region15: #{tpu_custom_call.1} parent=1 // pred_check_branch
      %36 = sbr.rel (0) target = $region17
    $region16: #{tpu_custom_call.1} parent=1 // pred_region
      %37 = dma.done [#allocation6], 2048
    $region17: #{tpu_custom_call.1} parent=1 // pred_fallthru
      _
    %v39 = vld [vmem:[#allocation2] sm:$0xf]
    %v40 = vld [vmem:[#allocation5] sm:$0xf]
    %v41 = vld [vmem:[#allocation5 + $0x4] sm:$0xf]
    %v42 = vld [vmem:[#allocation5 + $0x8] sm:$0xf]
    %v43 = vld [vmem:[#allocation5 + $0xc] sm:$0xf]
    %v44 = vld [vmem:[#allocation5 + $0x10] sm:$0xf]
    %v45 = vld [vmem:[#allocation5 + $0x14] sm:$0xf]
    %v46 = vld [vmem:[#allocation5 + $0x18] sm:$0xf]
    %v47 = vld [vmem:[#allocation5 + $0x1c] sm:$0xf]
    %v48 = vld [vmem:[#allocation5 + $0x20] sm:$0xf]
    %v49 = vld [vmem:[#allocation5 + $0x24] sm:$0xf]
    %v50 = vld [vmem:[#allocation5 + $0x28] sm:$0xf]
    %v51 = vld [vmem:[#allocation5 + $0x2c] sm:$0xf]
    %v52 = vld [vmem:[#allocation5 + $0x30] sm:$0xf]
    %v53 = vld [vmem:[#allocation5 + $0x34] sm:$0xf]
    %v54 = vld [vmem:[#allocation5 + $0x38] sm:$0xf]
    %v55 = vld [vmem:[#allocation5 + $0x3c] sm:$0xf]
    %v56 = vld [vmem:[#allocation5 + $0x40] sm:$0xf]
    %v57 = vld [vmem:[#allocation5 + $0x44] sm:$0xf]
    %v58 = vld [vmem:[#allocation5 + $0x48] sm:$0xf]
    %v59 = vld [vmem:[#allocation5 + $0x4c] sm:$0xf]
    %v60 = vld [vmem:[#allocation5 + $0x50] sm:$0xf]
    %v61 = vld [vmem:[#allocation5 + $0x54] sm:$0xf]
    %v62 = vld [vmem:[#allocation5 + $0x58] sm:$0xf]
    %v63 = vld [vmem:[#allocation5 + $0x5c] sm:$0xf]
    %v64 = vld [vmem:[#allocation5 + $0x60] sm:$0xf]
    %v65 = vld [vmem:[#allocation5 + $0x64] sm:$0xf]
    %v66 = vld [vmem:[#allocation5 + $0x68] sm:$0xf]
    %v67 = vld [vmem:[#allocation5 + $0x6c] sm:$0xf]
    %v68 = vld [vmem:[#allocation5 + $0x70] sm:$0xf]
    %v69 = vld [vmem:[#allocation5 + $0x74] sm:$0xf]
    %v70 = vld [vmem:[#allocation5 + $0x78] sm:$0xf]
    %v71 = vld [vmem:[#allocation5 + $0x7c] sm:$0xf]
    %v104 = vunpack.c.l.b16 %v40
    %v105 = vunpack.c.l.b16 %v41
    %v106 = vunpack.c.l.b16 %v42
    %v107 = vunpack.c.l.b16 %v43
    %v108 = vunpack.c.l.b16 %v44
    %v109 = vunpack.c.l.b16 %v45
    %v110 = vunpack.c.l.b16 %v46
    %v111 = vunpack.c.l.b16 %v47
    %v112 = vunpack.c.l.b16 %v48
    %v113 = vunpack.c.l.b16 %v49
    %v114 = vunpack.c.l.b16 %v50
    %v115 = vunpack.c.l.b16 %v51
    %v116 = vunpack.c.l.b16 %v52
    %v117 = vunpack.c.l.b16 %v53
    %v118 = vunpack.c.l.b16 %v54
    %v119 = vunpack.c.l.b16 %v55
    %v120 = vunpack.c.l.b16 %v56
    %v121 = vunpack.c.l.b16 %v57
    %v122 = vunpack.c.l.b16 %v58
    %v123 = vunpack.c.l.b16 %v59
    %v124 = vunpack.c.l.b16 %v60
    %v125 = vunpack.c.l.b16 %v61
    %v126 = vunpack.c.l.b16 %v62
    %v127 = vunpack.c.l.b16 %v63
    %v128 = vunpack.c.l.b16 %v64
    %v129 = vunpack.c.l.b16 %v65
    %v130 = vunpack.c.l.b16 %v66
    %v131 = vunpack.c.l.b16 %v67
    %v132 = vunpack.c.l.b16 %v68
    %v133 = vunpack.c.l.b16 %v69
    %v134 = vunpack.c.l.b16 %v70
    %v135 = vunpack.c.l.b16 %v71
    %v136 = vpack.c.b16 %v105, %v104
    %v137 = vpack.c.b16 %v107, %v106
    %v138 = vpack.c.b16 %v109, %v108
    %v139 = vpack.c.b16 %v111, %v110
    %v140 = vpack.c.b16 %v113, %v112
    %v141 = vpack.c.b16 %v115, %v114
    %v142 = vpack.c.b16 %v117, %v116
    %v143 = vpack.c.b16 %v119, %v118
    %v144 = vpack.c.b16 %v121, %v120
    %v145 = vpack.c.b16 %v123, %v122
    %v146 = vpack.c.b16 %v125, %v124
    %v147 = vpack.c.b16 %v127, %v126
    %v148 = vpack.c.b16 %v129, %v128
    %v149 = vpack.c.b16 %v131, %v130
    %v150 = vpack.c.b16 %v133, %v132
    %v151 = vpack.c.b16 %v135, %v134
    %168 = vmatprep.subr.bf16.mxu0 0
    %169 = vmatpush1.bf16.xpose.msra.mxu0 %v136
    %170 = vmatprep.subr.bf16.mxu0 0
    %171 = vmatpush1.bf16.xpose.msra.mxu0 %v137
    %172 = vmatprep.subr.bf16.mxu0 0
    %173 = vmatpush1.bf16.xpose.msra.mxu0 %v138
    %174 = vmatprep.subr.bf16.mxu0 0
    %175 = vmatpush1.bf16.xpose.msra.mxu0 %v139
    %176 = vmatprep.subr.bf16.mxu0 0
    %177 = vmatpush1.bf16.xpose.msra.mxu0 %v140
    %178 = vmatprep.subr.bf16.mxu0 0
    %179 = vmatpush1.bf16.xpose.msra.mxu0 %v141
    %180 = vmatprep.subr.bf16.mxu0 0
    %181 = vmatpush1.bf16.xpose.msra.mxu0 %v142
    %182 = vmatprep.subr.bf16.mxu0 0
    %183 = vmatpush1.bf16.xpose.msra.mxu0 %v143
    %184 = vmatprep.subr.bf16.mxu0 0
    %185 = vmatpush1.bf16.xpose.msra.mxu0 %v144
    %186 = vmatprep.subr.bf16.mxu0 0
    %187 = vmatpush1.bf16.xpose.msra.mxu0 %v145
    %188 = vmatprep.subr.bf16.mxu0 0
    %189 = vmatpush1.bf16.xpose.msra.mxu0 %v146
    %190 = vmatprep.subr.bf16.mxu0 0
    %191 = vmatpush1.bf16.xpose.msra.mxu0 %v147
    %192 = vmatprep.subr.bf16.mxu0 0
    %193 = vmatpush1.bf16.xpose.msra.mxu0 %v148
    %194 = vmatprep.subr.bf16.mxu0 0
    %195 = vmatpush1.bf16.xpose.msra.mxu0 %v149
    %196 = vmatprep.subr.bf16.mxu0 0
    %197 = vmatpush1.bf16.xpose.msra.mxu0 %v150
    %198 = vmatprep.subr.bf16.mxu0 0
    %199 = vmatpush1.bf16.xpose.msra.mxu0 %v151
    %200 = vmatprep.mubr.bf16.mxu0 0
    %201 = vmatmul.mubr.bf16.gmra.mrb[0].mxu0 %v39
    %v202 = vpop.f32.mrb[0].mxu0
    %v203 = vadd.f32 0.0, %v202
    %v204 = vpop.f32.mrb[0].mxu0
    %v205 = vadd.f32 0.0, %v204
    %v206 = vpop.f32.mrb[0].mxu0
    %v207 = vpop.f32.mrb[0].mxu0
    %208 = vdwg.mxu0
    %v209 = vxor.u32 %v203, 2147483648
    %v210 = vxor.u32 %v205, 2147483648
    %v211 = vmul.f32 %v209, 1.442695
    %v212 = vpow.pop %v211
    %v213 = vmul.f32 %v210, 1.442695
    %v214 = vpow.pop %v213
    %v215 = vadd.f32 %v212, 1.0
    %v216 = vadd.f32 %v214, 1.0
    %v217 = vrcp.pop %v215
    %v218 = vmul.f32 1.0, %v217
    %v219 = vrcp.pop %v216
    %v220 = vmul.f32 1.0, %v219
    %v221 = vpack.c.bf16 %v218, %v218
    %v222 = vpack.c.bf16 %v220, %v220
    %v225 = vunpack.c.l.b16 %v221
    %v226 = vunpack.c.l.b16 %v222
    %v227 = vpack.c.b16 %v226, %v225
    %229 = vst [vmem:[#allocation7] sm:$0xff] %v227
    // Predicated region
    $region18: #{tpu_custom_call.1} parent=1 // pred_check
      _
    $region19: #{tpu_custom_call.1} parent=1 // pred_check_branch
      %231 = sbr.rel (0) target = $region21
    $region20: #{tpu_custom_call.1} parent=1 // pred_region
      %s233 = ssub.s32 128, 128
      %234 = vsyncadd [#allocation4], %s233
      %s236 = sshll.u32 [#allocation7], 4
      %s237 = int_to_ptr.vmem [resolvable:$true] %s236
      %239 = dma.vmem_to_hbm [thread:$0]  %s237, 128, %s2, [#allocation4]
    $region21: #{tpu_custom_call.1} parent=1 // pred_fallthru
      _
    // Predicated region
    $region22: #{tpu_custom_call.1} parent=1 // pred_check
      _
    $region23: #{tpu_custom_call.1} parent=1 // pred_check_branch
      %241 = sbr.rel (0) target = $region25
    $region24: #{tpu_custom_call.1} parent=1 // pred_region
      %242 = dma.done [#allocation4], 128
    $region25: #{tpu_custom_call.1} parent=1 // pred_fallthru
      _
    %243 = vsyncpa [#allocation3], 1
    %244 = vsyncpa [#allocation6], 1
    %245 = vsyncpa [#allocation4], 1

</llo_original>
